<compile_context>
chip_gen: v6e
topology: v6e:2x2x1
jax: 0.10.0
libtpu: 0.0.40
codegen_flags: <defaults>
</compile_context>

<pallas_src>
import functools
import math

import jax
import jax.numpy as jnp
from jax.experimental import pallas as pl
from jax.experimental.pallas import tpu as pltpu


def _round_up(x, m):
    return (x + m - 1) // m * m


# ------------------------------ fused kernel --------------------------------

def _kc_fused_kernel(w_ref, x_ref, mask_ref, o_ref, act_ref, *,
                     H, W, C, n_layers, base):
    # w_ref:    (n_layers, C, 9C)  im2col-flattened weights          (VMEM)
    # x_ref:    (1, Hp*Wp)         padded input image, channel-major (VMEM)
    # mask_ref: (1, Hp*Wp)         1.0 on interior, 0.0 on halo      (VMEM)
    # o_ref:    (1, Hp*Wp)         network output (padded layout)    (VMEM)
    # act_ref:  (C, LP)            resident activation + zero margins (scratch)
    Hp, Wp = H + 2, W + 2
    LL = Hp * Wp
    # tap offsets in the flattened padded layout, order (dy, dx) = row-major
    offs = [(dy - 1) * Wp + (dx - 1) for dy in range(3) for dx in range(3)]

    # Init: zero the whole scratch (halo, margins, channels 1..C-1), then drop
    # the padded input image into channel 0 at lane offset `base`.
    act_ref[...] = jnp.zeros_like(act_ref)
    act_ref[pl.ds(0, 1), pl.ds(base, LL)] = x_ref[...]

    # Border mask, broadcast once (hoisted out of the layer loop).
    mask = jnp.broadcast_to(mask_ref[...], (C, LL))

    def conv3x3(layer_idx):
        # im2col: 9 shifted (C, LL) views stacked along the contraction dim.
        cols = jnp.concatenate(
            [act_ref[:, pl.ds(base + o, LL)] for o in offs], axis=0)  # (9C, LL)
        w2 = w_ref[layer_idx]                                         # (C, 9C)
        return jnp.dot(w2, cols, preferred_element_type=jnp.float32)  # (C, LL)

    def relu_layer(i, carry):
        z = conv3x3(i)
        # ReLU + re-zero the halo so it keeps acting as SAME padding.
        act_ref[:, pl.ds(base, LL)] = jnp.maximum(z, 0.0) * mask
        return carry

    # Input conv + the 18 Conv_ReLU_Blocks (all conv3x3 + ReLU).
    jax.lax.fori_loop(0, n_layers - 1, relu_layer, 0)

    # Output conv (no ReLU) + fused residual add; only channel 0 is real
    # (the output conv's Cout was zero-padded from 1 to C).
    z = conv3x3(n_layers - 1)
    o_ref[...] = (z[0:1, :] + x_ref[...]) * mask_ref[...]


# ------------------------------ JAX wrapper ---------------------------------

def _prep_weights(params, C):
    """(3,3,Cin,Cout) HWIO weights -> stacked (L, C, 9C) im2col matrices."""
    mats = []
    for w in params:
        cin, cout = w.shape[2], w.shape[3]
        wp = jnp.zeros((3, 3, C, C), jnp.float32).at[:, :, :cin, :cout].set(
            w.astype(jnp.float32))
        mats.append(wp.reshape(9 * C, C).T)        # (C, 9C), row = k*C + cin
    return jnp.stack(mats)                          # (n_layers, C, 9C)


def kc_net_forward(x_nchw, params, *, channels=8):
    """KC_Net forward.  x_nchw: (N, 1, H, W).  params: list of (3,3,Cin,Cout)."""
    N, _, H, W = x_nchw.shape
    C = channels
    Hp, Wp = H + 2, W + 2
    LL = Hp * Wp
    n_layers = len(params)

    base = _round_up(Wp + 1, 128)             # lane-aligned activation offset
    LP = _round_up(base + LL + Wp + 1, 128)   # scratch lanes incl. zero margins

    # One-time layout prep in XLA (the 20 per-layer pads of the old version
    # are gone).
    x_cm = jnp.pad(x_nchw[:, 0].astype(jnp.float32),
                   ((0, 0), (1, 1), (1, 1))).reshape(N, 1, LL)
    w_all = _prep_weights(params, C)                                # (L, C, 9C)
    mask = jnp.pad(jnp.ones((H, W), jnp.float32),
                   ((1, 1), (1, 1))).reshape(1, LL)

    flops = 2 * n_layers * N * H * W * (9 * C) * C
    bytes_accessed = 4 * (x_cm.size + w_all.size + mask.size + N * LL)

    out_flat = pl.pallas_call(
        functools.partial(_kc_fused_kernel, H=H, W=W, C=C,
                          n_layers=n_layers, base=base),
        out_shape=jax.ShapeDtypeStruct((N, 1, LL), jnp.float32),
        grid=(N,),
        in_specs=[
            pl.BlockSpec((n_layers, C, 9 * C), lambda n: (0, 0, 0)),  # weights
            pl.BlockSpec((None, 1, LL), lambda n: (n, 0, 0)),         # image n
            pl.BlockSpec((1, LL), lambda n: (0, 0)),                  # mask
        ],
        out_specs=pl.BlockSpec((None, 1, LL), lambda n: (n, 0, 0)),
        scratch_shapes=[pltpu.VMEM((C, LP), jnp.float32)],
        compiler_params=pltpu.CompilerParams(
            dimension_semantics=("parallel",)),
        cost_estimate=pl.CostEstimate(flops=flops, transcendentals=0,
                                      bytes_accessed=bytes_accessed),
    )(w_all, x_cm, mask)

    out = out_flat.reshape(N, Hp, Wp)[:, 1:-1, 1:-1]   # strip the halo
    return out[:, None, :, :]                          # (N, 1, H, W)


# ----------------------- deterministic parameter init -----------------------

def init_kc_net_params(key, channels=8, num_residual=18):
    """Mimics the PyTorch init: normal(0, sqrt(2 / (k*k*Cout))), no bias."""
    shapes = [(channels, 1, 3, 3)]                          # input conv: 1 -> C
    shapes += [(channels, channels, 3, 3)] * num_residual   # 18 residual blocks
    shapes += [(1, channels, 3, 3)]                         # output conv: C -> 1
    params = []
    for shp in shapes:
        cout = shp[0]
        std = math.sqrt(2.0 / (3 * 3 * cout))
        key, sub = jax.random.split(key)
        w = std * jax.random.normal(sub, shp, jnp.float32)
        params.append(jnp.transpose(w, (2, 3, 1, 0)))       # -> (kh,kw,Cin,Cout)
    return params


# -------------------------------- reference ---------------------------------

def kc_net_reference(x_nchw, params):
    x = jnp.transpose(x_nchw, (0, 2, 3, 1))
    residual = x

    def conv(v, w):
        return jax.lax.conv_general_dilated(
            v, w, window_strides=(1, 1), padding="SAME",
            dimension_numbers=("NHWC", "HWIO", "NHWC"))

    out = jax.nn.relu(conv(x, params[0]))
    for w in params[1:-1]:
        out = jax.nn.relu(conv(out, w))
    out = conv(out, params[-1]) + residual
    return jnp.transpose(out, (0, 3, 1, 2))


# ----------------------------------- main ------------------------------------

if __name__ == "__main__":
    key = jax.random.PRNGKey(0)
    kx, kp = jax.random.split(key)

    N, H, W = 2, 16, 16
    x = jax.random.normal(kx, (N, 1, H, W), jnp.float32)    # NCHW, 1 channel
    params = init_kc_net_params(kp, channels=8, num_residual=18)

    out = jax.jit(kc_net_forward)(x, params)
    out = jax.block_until_ready(out)

    ref = kc_net_reference(x, params)
    assert out.shape == (N, 1, H, W)
    max_err = float(jnp.max(jnp.abs(out - ref)))
    assert jnp.allclose(out, ref, atol=1e-3, rtol=1e-3), (
        f"mismatch vs reference (max abs err {max_err})")

    print("KERNEL_OK")
</pallas_src>

<mosaic_0001>
module attributes {stable_mosaic.version = 11 : i64} {
  func.func @_kc_fused_kernel(%arg0: i32, %arg1: memref<20x8x72xf32, #tpu.memory_space<vmem>>, %arg2: memref<1x1x324xf32, #tpu.memory_space<vmem>>, %arg3: memref<1x324xf32, #tpu.memory_space<vmem>>, %arg4: memref<1x1x324xf32, #tpu.memory_space<vmem>>, %arg5: memref<8x512xf32, #tpu.memory_space<vmem>>) attributes {dimension_semantics = [#tpu.dimension_semantics<parallel>], iteration_bounds = array<i64: 2>, scalar_prefetch = 0 : i64, scratch_operands = 1 : i64, tpu.core_type = #tpu.core_type<tc>, window_params = [{pipeline_mode = #tpu.pipeline_mode<synchronous>, transform_indices = @transform_0, window_bounds = array<i64: 20, 8, 72>}, {transform_indices = @transform_1, window_bounds = array<i64: 1, 1, 324>}, {pipeline_mode = #tpu.pipeline_mode<synchronous>, transform_indices = @transform_2, window_bounds = array<i64: 1, 324>}, {transform_indices = @transform_3, window_bounds = array<i64: 1, 1, 324>}]} {
    %cst = arith.constant 0.000000e+00 : f32
    %0 = vector.broadcast %cst : f32 to vector<8x512xf32>
    %c0 = arith.constant 0 : index
    %c0_0 = arith.constant 0 : index
    %1 = vector.load %arg5[%c0, %c0_0] : memref<8x512xf32, #tpu.memory_space<vmem>>, vector<8x512xf32>
    tpu.vector_store %arg5[%c0, %c0_0], %0 {strides = array<i32>} : memref<8x512xf32, #tpu.memory_space<vmem>>, vector<8x512xf32>,
    %c0_1 = arith.constant 0 : index
    %c0_2 = arith.constant 0 : index
    %c0_3 = arith.constant 0 : index
    %2 = vector.load %arg2[%c0_1, %c0_2, %c0_3] : memref<1x1x324xf32, #tpu.memory_space<vmem>>, vector<1x1x324xf32>
    %3 = vector.shape_cast %2 : vector<1x1x324xf32> to vector<1x324xf32>
    %c0_4 = arith.constant 0 : index
    %c128 = arith.constant 128 : index
    %4 = vector.load %arg5[%c0_4, %c128] : memref<8x512xf32, #tpu.memory_space<vmem>>, vector<1x324xf32>
    tpu.vector_store %arg5[%c0_4, %c128], %3 {strides = array<i32>} : memref<8x512xf32, #tpu.memory_space<vmem>>, vector<1x324xf32>,
    %c0_5 = arith.constant 0 : index
    %c0_6 = arith.constant 0 : index
    %5 = vector.load %arg3[%c0_5, %c0_6] : memref<1x324xf32, #tpu.memory_space<vmem>>, vector<1x324xf32>
    %6 = vector.shape_cast %5 : vector<1x324xf32> to vector<1x324xf32>
    %7 = vector.broadcast %6 : vector<1x324xf32> to vector<8x324xf32>
    %c0_i32 = arith.constant 0 : i32
    %c19_i32 = arith.constant 19 : i32
    %8 = arith.addi %c0_i32, %c19_i32 : i32
    %c1_i32 = arith.constant 1 : i32
    scf.for %arg6 = %c0_i32 to %8 step %c1_i32  : i32 {
      %c0_29 = arith.constant 0 : index
      %c109_30 = arith.constant 109 : index
      %31 = vector.load %arg5[%c0_29, %c109_30] : memref<8x512xf32, #tpu.memory_space<vmem>>, vector<8x324xf32>
      %c0_31 = arith.constant 0 : index
      %c110_32 = arith.constant 110 : index
      %32 = vector.load %arg5[%c0_31, %c110_32] : memref<8x512xf32, #tpu.memory_space<vmem>>, vector<8x324xf32>
      %c0_33 = arith.constant 0 : index
      %c111_34 = arith.constant 111 : index
      %33 = vector.load %arg5[%c0_33, %c111_34] : memref<8x512xf32, #tpu.memory_space<vmem>>, vector<8x324xf32>
      %c0_35 = arith.constant 0 : index
      %c127_36 = arith.constant 127 : index
      %34 = vector.load %arg5[%c0_35, %c127_36] : memref<8x512xf32, #tpu.memory_space<vmem>>, vector<8x324xf32>
      %c0_37 = arith.constant 0 : index
      %c128_38 = arith.constant 128 : index
      %35 = vector.load %arg5[%c0_37, %c128_38] : memref<8x512xf32, #tpu.memory_space<vmem>>, vector<8x324xf32>
      %c0_39 = arith.constant 0 : index
      %c129_40 = arith.constant 129 : index
      %36 = vector.load %arg5[%c0_39, %c129_40] : memref<8x512xf32, #tpu.memory_space<vmem>>, vector<8x324xf32>
      %c0_41 = arith.constant 0 : index
      %c145_42 = arith.constant 145 : index
      %37 = vector.load %arg5[%c0_41, %c145_42] : memref<8x512xf32, #tpu.memory_space<vmem>>, vector<8x324xf32>
      %c0_43 = arith.constant 0 : index
      %c146_44 = arith.constant 146 : index
      %38 = vector.load %arg5[%c0_43, %c146_44] : memref<8x512xf32, #tpu.memory_space<vmem>>, vector<8x324xf32>
      %c0_45 = arith.constant 0 : index
      %c147_46 = arith.constant 147 : index
      %39 = vector.load %arg5[%c0_45, %c147_46] : memref<8x512xf32, #tpu.memory_space<vmem>>, vector<8x324xf32>
      %40 = tpu.concatenate %31, %32, %33, %34, %35, %36, %37, %38, %39 in 0 : vector<8x324xf32>, vector<8x324xf32>, vector<8x324xf32>, vector<8x324xf32>, vector<8x324xf32>, vector<8x324xf32>, vector<8x324xf32>, vector<8x324xf32>, vector<8x324xf32> -> vector<72x324xf32>
      %41 = arith.index_cast %arg6 : i32 to index
      %c0_47 = arith.constant 0 : index
      %c0_48 = arith.constant 0 : index
      %42 = vector.load %arg1[%41, %c0_47, %c0_48] : memref<20x8x72xf32, #tpu.memory_space<vmem>>, vector<1x8x72xf32>
      %43 = vector.shape_cast %42 : vector<1x8x72xf32> to vector<8x72xf32>
      %cst_49 = arith.constant dense<0.000000e+00> : vector<8x324xf32>
      %44 = tpu.matmul %43, %40, %cst_49 {dimension_numbers = #tpu.dot_dimension_numbers<[1], [0], [0], [1], [0, 0, 1, 1], [], []>} : vector<8x72xf32>, vector<72x324xf32>, vector<8x324xf32> -> vector<8x324xf32>
      %cst_50 = arith.constant 0.000000e+00 : f32
      %45 = vector.broadcast %cst_50 : f32 to vector<8x324xf32>
      %46 = arith.maximumf %44, %45 : vector<8x324xf32>
      %47 = arith.mulf %46, %7 : vector<8x324xf32>
      %c0_51 = arith.constant 0 : index
      %c128_52 = arith.constant 128 : index
      %48 = vector.load %arg5[%c0_51, %c128_52] : memref<8x512xf32, #tpu.memory_space<vmem>>, vector<8x324xf32>
      tpu.vector_store %arg5[%c0_51, %c128_52], %47 {strides = array<i32>} : memref<8x512xf32, #tpu.memory_space<vmem>>, vector<8x324xf32>,
    }
    %c19_i32_7 = arith.constant 19 : i32
    %c0_8 = arith.constant 0 : index
    %c109 = arith.constant 109 : index
    %9 = vector.load %arg5[%c0_8, %c109] : memref<8x512xf32, #tpu.memory_space<vmem>>, vector<8x324xf32>
    %c0_9 = arith.constant 0 : index
    %c110 = arith.constant 110 : index
    %10 = vector.load %arg5[%c0_9, %c110] : memref<8x512xf32, #tpu.memory_space<vmem>>, vector<8x324xf32>
    %c0_10 = arith.constant 0 : index
    %c111 = arith.constant 111 : index
    %11 = vector.load %arg5[%c0_10, %c111] : memref<8x512xf32, #tpu.memory_space<vmem>>, vector<8x324xf32>
    %c0_11 = arith.constant 0 : index
    %c127 = arith.constant 127 : index
    %12 = vector.load %arg5[%c0_11, %c127] : memref<8x512xf32, #tpu.memory_space<vmem>>, vector<8x324xf32>
    %c0_12 = arith.constant 0 : index
    %c128_13 = arith.constant 128 : index
    %13 = vector.load %arg5[%c0_12, %c128_13] : memref<8x512xf32, #tpu.memory_space<vmem>>, vector<8x324xf32>
    %c0_14 = arith.constant 0 : index
    %c129 = arith.constant 129 : index
    %14 = vector.load %arg5[%c0_14, %c129] : memref<8x512xf32, #tpu.memory_space<vmem>>, vector<8x324xf32>
    %c0_15 = arith.constant 0 : index
    %c145 = arith.constant 145 : index
    %15 = vector.load %arg5[%c0_15, %c145] : memref<8x512xf32, #tpu.memory_space<vmem>>, vector<8x324xf32>
    %c0_16 = arith.constant 0 : index
    %c146 = arith.constant 146 : index
    %16 = vector.load %arg5[%c0_16, %c146] : memref<8x512xf32, #tpu.memory_space<vmem>>, vector<8x324xf32>
    %c0_17 = arith.constant 0 : index
    %c147 = arith.constant 147 : index
    %17 = vector.load %arg5[%c0_17, %c147] : memref<8x512xf32, #tpu.memory_space<vmem>>, vector<8x324xf32>
    %18 = tpu.concatenate %9, %10, %11, %12, %13, %14, %15, %16, %17 in 0 : vector<8x324xf32>, vector<8x324xf32>, vector<8x324xf32>, vector<8x324xf32>, vector<8x324xf32>, vector<8x324xf32>, vector<8x324xf32>, vector<8x324xf32>, vector<8x324xf32> -> vector<72x324xf32>
    %c19 = arith.constant 19 : index
    %c0_18 = arith.constant 0 : index
    %c0_19 = arith.constant 0 : index
    %19 = vector.load %arg1[%c19, %c0_18, %c0_19] : memref<20x8x72xf32, #tpu.memory_space<vmem>>, vector<1x8x72xf32>
    %20 = vector.shape_cast %19 : vector<1x8x72xf32> to vector<8x72xf32>
    %cst_20 = arith.constant dense<0.000000e+00> : vector<8x324xf32>
    %21 = tpu.matmul %20, %18, %cst_20 {dimension_numbers = #tpu.dot_dimension_numbers<[1], [0], [0], [1], [0, 0, 1, 1], [], []>} : vector<8x72xf32>, vector<72x324xf32>, vector<8x324xf32> -> vector<8x324xf32>
    %22 = vector.extract_strided_slice %21 {offsets = [0, 0], sizes = [1, 324], strides = [1, 1]} : vector<8x324xf32> to vector<1x324xf32>
    %c0_21 = arith.constant 0 : index
    %c0_22 = arith.constant 0 : index
    %c0_23 = arith.constant 0 : index
    %23 = vector.load %arg2[%c0_21, %c0_22, %c0_23] : memref<1x1x324xf32, #tpu.memory_space<vmem>>, vector<1x1x324xf32>
    %24 = vector.shape_cast %23 : vector<1x1x324xf32> to vector<1x324xf32>
    %25 = arith.addf %22, %24 : vector<1x324xf32>
    %c0_24 = arith.constant 0 : index
    %c0_25 = arith.constant 0 : index
    %26 = vector.load %arg3[%c0_24, %c0_25] : memref<1x324xf32, #tpu.memory_space<vmem>>, vector<1x324xf32>
    %27 = arith.mulf %25, %26 : vector<1x324xf32>
    %c0_26 = arith.constant 0 : index
    %c0_27 = arith.constant 0 : index
    %c0_28 = arith.constant 0 : index
    %28 = vector.load %arg4[%c0_26, %c0_27, %c0_28] : memref<1x1x324xf32, #tpu.memory_space<vmem>>, vector<1x1x324xf32>
    %29 = vector.shape_cast %28 : vector<1x1x324xf32> to vector<1x324xf32>
    %30 = vector.shape_cast %27 : vector<1x324xf32> to vector<1x1x324xf32>
    tpu.vector_store %arg4[%c0_26, %c0_27, %c0_28], %30 {strides = array<i32>} : memref<1x1x324xf32, #tpu.memory_space<vmem>>, vector<1x1x324xf32>,
    return
  }
  func.func @transform_0(%arg0: i32) -> (i32, i32, i32) {
    %c0_i32 = arith.constant 0 : i32
    %c0_i32_0 = arith.constant 0 : i32
    %c0_i32_1 = arith.constant 0 : i32
    %c0_i32_2 = arith.constant 0 : i32
    return %c0_i32, %c0_i32_0, %c0_i32_1 : i32, i32, i32
  }
  func.func @transform_1(%arg0: i32) -> (i32, i32, i32) {
    %c0_i32 = arith.constant 0 : i32
    %c0_i32_0 = arith.constant 0 : i32
    %c0_i32_1 = arith.constant 0 : i32
    return %arg0, %c0_i32, %c0_i32_0 : i32, i32, i32
  }
  func.func @transform_2(%arg0: i32) -> (i32, i32) {
    %c0_i32 = arith.constant 0 : i32
    %c0_i32_0 = arith.constant 0 : i32
    %c0_i32_1 = arith.constant 0 : i32
    return %c0_i32, %c0_i32_0 : i32, i32
  }
  func.func @transform_3(%arg0: i32) -> (i32, i32, i32) {
    %c0_i32 = arith.constant 0 : i32
    %c0_i32_0 = arith.constant 0 : i32
    %c0_i32_1 = arith.constant 0 : i32
    return %arg0, %c0_i32, %c0_i32_0 : i32, i32, i32
  }
}

</mosaic_0001>

<llo_original>
// kernel: kc_net_forward.1
$region0: #{kc_net_forward.1}
  #allocation0 [shape = 'u32[]', space=smem, size = 0x4, offset = 0x4, fixed_abs, tag = 'smem constant byte address 0x4 - core index']
  #allocation1 [shape = 'u32[144,128]{1,0:T(1,128)}', space=vmem, size = 0x12000, scoped, tag = 'internal scratch']
  #allocation2 [shape = 'f32[8,512]{1,0:T(8,128)}', space=vmem, size = 0x4000, scoped, tag = 'scratch operand']
  %s0 = inlined_call_operand.vmem [shape: f32[20,8,72], index: 0, kind: input, shape index: {}]
  %s1 = inlined_call_operand.vmem [shape: f32[2,1,324], index: 1, kind: input, shape index: {}]
  %s2 = inlined_call_operand.vmem [shape: f32[1,324], index: 2, kind: input, shape index: {}]
  %s3 = inlined_call_operand.vmem [shape: f32[2,1,324], index: 3, kind: output, shape index: {}]
  %s4 = sld [smem:[#allocation0]]
  $region52: #{kc_net_forward.1} parent=0
    _
  %s6 = ssub.s32 1, %s4
  %s7 = scalar_select 0, %s6, %s4
  loop: start=0, step=1, limit=4
  $region2: #{kc_net_forward.1} parent=0 // loop_pre_header
    _
  $region3: #{kc_net_forward.1} parent=0 // loop_header
    %s9 = sphi 0, %s13
    %p10 = scmp.ge.s32.totalorder %s9, 4
    %s17 = sphi 0, %s17
    %s19 = sphi 0, %s17
    %s20 = sphi 0, %s19
    %s34 = sphi 0, %s20
    %s40 = sphi 0, %s42
    %s43 = sphi 0, %s40
    %s44 = sphi 0, %s43
    %s60 = sphi 0, %s44
    %s64 = sphi 0, %s64
    %s66 = sphi 0, %s64
    %s67 = sphi 0, %s66
    %s81 = sphi 0, %s67
    %s87 = sphi 0, %s89
    %s90 = sphi 0, %s87
    %s91 = sphi 0, %s90
    %s107 = sphi 0, %s91
  $region4: #{kc_net_forward.1} parent=0 // loop_header_branch
    %12 = sbr.rel (%p10) target = $region8
  $region5: #{kc_net_forward.1} parent=0 // loop_body
    %s14 = ssub.s32 %s9, 1
    %s15 = ssub.s32 %s9, 2
    %s16 = sadd.s32 %s9, 1
    %s18 = sadd.s32 %s17, 1
    %p21 = scmp.eq.s32.totalorder %s9, 1
    %p22 = scmp.ne.s32.totalorder %s17, %s19
    %p23 = scmp.eq.s32.totalorder %s9, 0
    %p24 = por %p22, %p23
    %p25 = scmp.ne.s32.totalorder %s17, %s19
    %p26 = scmp.eq.s32.totalorder %s14, 1
    %p27 = por %p25, %p26
    %p28 = scmp.ne.s32.totalorder %s19, %s20
    %p29 = scmp.eq.s32.totalorder %s14, 0
    %p30 = por %p28, %p29
    %p31 = scmp.ne.s32.totalorder %s19, %s20
    %p32 = scmp.eq.s32.totalorder %s15, 1
    %p33 = por %p31, %p32
    %p35 = scmp.ne.s32.totalorder %s20, %s34
    %p36 = scmp.eq.s32.totalorder %s15, 0
    %p37 = por %p35, %p36
    %s38 = ssub.s32 %s9, %s16
    %p39 = scmp.eq.s32.totalorder %s38, 0
    %s41 = sadd.s32 %s40, 1
    %s42 = scalar_select %p39, %s40, %s41
    %p45 = pneg %p39
    %p46 = scmp.eq.s32.totalorder %s9, 1
    %p47 = por %p45, %p46
    %p48 = scmp.ne.s32.totalorder %s40, %s43
    %p49 = scmp.eq.s32.totalorder %s9, 0
    %p50 = por %p48, %p49
    %p51 = scmp.ne.s32.totalorder %s40, %s43
    %p52 = scmp.eq.s32.totalorder %s14, 1
    %p53 = por %p51, %p52
    %p54 = scmp.ne.s32.totalorder %s43, %s44
    %p55 = scmp.eq.s32.totalorder %s14, 0
    %p56 = por %p54, %p55
    %p57 = scmp.ne.s32.totalorder %s43, %s44
    %p58 = scmp.eq.s32.totalorder %s15, 1
    %p59 = por %p57, %p58
    %p61 = scmp.ne.s32.totalorder %s44, %s60
    %p62 = scmp.eq.s32.totalorder %s15, 0
    %p63 = por %p61, %p62
    %s65 = sadd.s32 %s64, 1
    %p68 = scmp.eq.s32.totalorder %s9, 1
    %p69 = scmp.ne.s32.totalorder %s64, %s66
    %p70 = scmp.eq.s32.totalorder %s9, 0
    %p71 = por %p69, %p70
    %p72 = scmp.ne.s32.totalorder %s64, %s66
    %p73 = scmp.eq.s32.totalorder %s14, 1
    %p74 = por %p72, %p73
    %p75 = scmp.ne.s32.totalorder %s66, %s67
    %p76 = scmp.eq.s32.totalorder %s14, 0
    %p77 = por %p75, %p76
    %p78 = scmp.ne.s32.totalorder %s66, %s67
    %p79 = scmp.eq.s32.totalorder %s15, 1
    %p80 = por %p78, %p79
    %p82 = scmp.ne.s32.totalorder %s67, %s81
    %p83 = scmp.eq.s32.totalorder %s15, 0
    %p84 = por %p82, %p83
    %s85 = ssub.s32 %s9, %s16
    %p86 = scmp.eq.s32.totalorder %s85, 0
    %s88 = sadd.s32 %s87, 1
    %s89 = scalar_select %p86, %s87, %s88
    %p92 = pneg %p86
    %p93 = scmp.eq.s32.totalorder %s9, 1
    %p94 = por %p92, %p93
    %p95 = scmp.ne.s32.totalorder %s87, %s90
    %p96 = scmp.eq.s32.totalorder %s9, 0
    %p97 = por %p95, %p96
    %p98 = scmp.ne.s32.totalorder %s87, %s90
    %p99 = scmp.eq.s32.totalorder %s14, 1
    %p100 = por %p98, %p99
    %p101 = scmp.ne.s32.totalorder %s90, %s91
    %p102 = scmp.eq.s32.totalorder %s14, 0
    %p103 = por %p101, %p102
    %p104 = scmp.ne.s32.totalorder %s90, %s91
    %p105 = scmp.eq.s32.totalorder %s15, 1
    %p106 = por %p104, %p105
    %p108 = scmp.ne.s32.totalorder %s91, %s107
    %p109 = scmp.eq.s32.totalorder %s15, 0
    %p110 = por %p108, %p109
    %p111 = scmp.le.s32.totalorder 1, %s9
    %p112 = scmp.lt.s32.totalorder %s9, 3
    %p113 = pnand %p111, %p112
    %p114 = pneg %p113
    // Predicated region
    $region9: #{kc_net_forward.1} parent=5 // pred_check
      _
    $region10: #{kc_net_forward.1} parent=5 // pred_check_branch
      %116 = sbr.rel (%p113) target = $region12
    $region11: #{kc_net_forward.1} parent=5 // pred_region
      %s117 = ssub.s32 %s9, 1
      // Predicated region
      $region13: #{kc_net_forward.1} parent=11 // pred_check
        %p118 = pneg %p30
      $region14: #{kc_net_forward.1} parent=11 // pred_check_branch
        %120 = sbr.rel (%p118) target = $region16
      $region15: #{kc_net_forward.1} parent=11 // pred_region
        _
      $region16: #{kc_net_forward.1} parent=11 // pred_fallthru
        _
      // Predicated region
      $region17: #{kc_net_forward.1} parent=11 // pred_check
        %p121 = pneg %p77
      $region18: #{kc_net_forward.1} parent=11 // pred_check_branch
        %123 = sbr.rel (%p121) target = $region20
      $region19: #{kc_net_forward.1} parent=11 // pred_region
        _
      $region20: #{kc_net_forward.1} parent=11 // pred_fallthru
        _
    $region12: #{kc_net_forward.1} parent=5 // pred_fallthru
      _
    %p124 = scmp.lt.s32.totalorder %s9, 2
    // Predicated region
    $region21: #{kc_net_forward.1} parent=5 // pred_check
      %p125 = pneg %p124
    $region22: #{kc_net_forward.1} parent=5 // pred_check_branch
      %127 = sbr.rel (%p125) target = $region24
    $region23: #{kc_net_forward.1} parent=5 // pred_region
      // Predicated region
      $region25: #{kc_net_forward.1} parent=23 // pred_check
        %p128 = pneg %p50
      $region26: #{kc_net_forward.1} parent=23 // pred_check_branch
        %130 = sbr.rel (%p128) target = $region28
      $region27: #{kc_net_forward.1} parent=23 // pred_region
        %p131 = scmp.lt.s32.totalorder %s9, 1
        %s132 = scalar_select %p131, %s9, 1
        %s133 = smul.addr %s132, 3
        %s134 = scalar_lea.vmem %s1, %s133
      $region28: #{kc_net_forward.1} parent=23 // pred_fallthru
        _
    $region24: #{kc_net_forward.1} parent=5 // pred_fallthru
      _
    %p135 = scmp.le.s32.totalorder 1, %s9
    %p136 = scmp.lt.s32.totalorder %s9, 3
    %p137 = pnand %p135, %p136
    %p138 = pneg %p137
    // Predicated region
    $region29: #{kc_net_forward.1} parent=5 // pred_check
      _
    $region30: #{kc_net_forward.1} parent=5 // pred_check_branch
      %140 = sbr.rel (%p137) target = $region32
    $region31: #{kc_net_forward.1} parent=5 // pred_region
      %s141 = ssub.s32 %s9, 1
      %p142 = pneg %p30
      %p143 = pneg %p27
      %p144 = scmp.lt.s32.totalorder %s14, 1
      %s145 = scalar_select %p144, %s14, 1
      %s146 = smul.addr %s145, 3
      %s147 = scalar_lea.vmem %s1, %s146
      %p148 = pneg %p56
      %p149 = pneg %p53
      %p150 = pneg %p77
      %p151 = pneg %p74
      %p152 = pneg %p103
      %p153 = pneg %p100
      %p154 = scmp.lt.s32.totalorder %s14, 1
      %s155 = scalar_select %p154, %s14, 1
      %s156 = smul.addr %s155, 3
      %s157 = scalar_lea.vmem %s3, %s156
      %p158 = scmp.lt.s32.totalorder %s14, 1
      %s159 = scalar_select %p158, %s14, 1
      %s160 = smul.addr %s159, 3
      %s161 = scalar_lea.vmem %s1, %s160
      %p162 = scmp.lt.s32.totalorder %s14, 1
      %s163 = scalar_select %p162, %s14, 1
      %s164 = smul.addr %s163, 3
      %s165 = scalar_lea.vmem %s3, %s164
      %166 = vst [vmem:[#allocation2] sm:$0xff] 0.0
      %167 = vst [vmem:[#allocation2 + $0x8] sm:$0xff] 0.0
      %168 = vst [vmem:[#allocation2 + $0x10] sm:$0xff] 0.0
      %169 = vst [vmem:[#allocation2 + $0x18] sm:$0xff] 0.0
      %v170 = vld [vmem:[%s161] sm:$0x7]
      %v171 = vlaneseq
      %vm172 = vcmp.ge.s32.totalorder %v171, 0
      %vm173 = vcmp.lt.s32.totalorder %v171, 324
      %vm174 = vmand %vm172, %vm173
      %s175 = scalar_lea.vmem [#allocation2], 8
      %176 = vst.msk [vmem:[%s175] ss:$8 sm:$0x7] %vm174, %v170
      %177 = vst.msk [vmem:[%s175] ss:$8 sm:$0x0] %vm174, %v170
      %v178 = vld [vmem:[%s2] sm:$0x7]
      %v180 = vlaneseq
      %v181 = vshrl.u32 %v180, 7
      %v182 = vsub.s32 0, %v181
      %v183 = vrot.slane %v178, %v182
      %v184 = vlaneseq
      %v185 = vshrl.u32 %v184, 7
      %v186 = vsub.s32 1, %v185
      %v187 = vrot.slane %v178, %v186
      %v188 = vlaneseq
      %v189 = vshrl.u32 %v188, 7
      %v190 = vsub.s32 2, %v189
      %v191 = vrot.slane %v178, %v190
      loop: start=0, step=1, limit=19
      $region33: #{kc_net_forward.1} parent=31 // loop_pre_header
        _
      $region34: #{kc_net_forward.1} parent=31 // loop_header
        %s196 = sphi 0, %s200
        %p197 = scmp.ge.s32.totalorder %s196, 19
      $region35: #{kc_net_forward.1} parent=31 // loop_header_branch
        %199 = sbr.rel (%p197) target = $region39
      $region36: #{kc_net_forward.1} parent=31 // loop_body
        %v201 = vld [vmem:[#allocation2] sm:$0xff]
        %v202 = vld [vmem:[#allocation2 + $0x8] sm:$0xff]
        %v203 = vld [vmem:[#allocation2 + $0x10] sm:$0xff]
        %v204 = vld [vmem:[#allocation2 + $0x18] sm:$0xff]
        %209 = vrot.lane.b32.xlu0 %v201, 127
        %v210 = vpop.permute.xlu0 %209
        %211 = vrot.lane.b32.xlu0 %v202, 127
        %v212 = vpop.permute.xlu0 %211
        %213 = vrot.lane.b32.xlu0 %v203, 127
        %v214 = vpop.permute.xlu0 %213
        %215 = vrot.lane.b32.xlu0 %v204, 127
        %v216 = vpop.permute.xlu0 %215
        %vm217 = vcmask 1039360
        %v218 = vsel %vm217, %v210, %v212
        %v219 = vsel %vm217, %v212, %v214
        %v220 = vsel %vm217, %v214, %v216
        %221 = vrot.lane.b32.xlu0 %v201, 126
        %v222 = vpop.permute.xlu0 %221
        %223 = vrot.lane.b32.xlu0 %v202, 126
        %v224 = vpop.permute.xlu0 %223
        %225 = vrot.lane.b32.xlu0 %v203, 126
        %v226 = vpop.permute.xlu0 %225
        %227 = vrot.lane.b32.xlu0 %v204, 126
        %v228 = vpop.permute.xlu0 %227
        %vm229 = vcmask 1031168
        %v230 = vsel %vm229, %v222, %v224
        %v231 = vsel %vm229, %v224, %v226
        %v232 = vsel %vm229, %v226, %v228
        %233 = vrot.lane.b32.xlu0 %v201, 110
        %v234 = vpop.permute.xlu0 %233
        %235 = vrot.lane.b32.xlu0 %v202, 110
        %v236 = vpop.permute.xlu0 %235
        %237 = vrot.lane.b32.xlu0 %v203, 110
        %v238 = vpop.permute.xlu0 %237
        %239 = vrot.lane.b32.xlu0 %v204, 110
        %v240 = vpop.permute.xlu0 %239
        %vm241 = vcmask 900096
        %v242 = vsel %vm241, %v234, %v236
        %v243 = vsel %vm241, %v236, %v238
        %v244 = vsel %vm241, %v238, %v240
        %245 = vrot.lane.b32.xlu0 %v202, 109
        %v246 = vpop.permute.xlu0 %245
        %247 = vrot.lane.b32.xlu0 %v203, 109
        %v248 = vpop.permute.xlu0 %247
        %249 = vrot.lane.b32.xlu0 %v204, 109
        %v250 = vpop.permute.xlu0 %249
        %vm251 = vcmask 891904
        %v252 = vsel %vm251, %v246, %v248
        %v253 = vsel %vm251, %v248, %v250
        %254 = vrot.lane.b32.xlu0 %v202, 108
        %v255 = vpop.permute.xlu0 %254
        %256 = vrot.lane.b32.xlu0 %v203, 108
        %v257 = vpop.permute.xlu0 %256
        %258 = vrot.lane.b32.xlu0 %v204, 108
        %v259 = vpop.permute.xlu0 %258
        %vm260 = vcmask 883712
        %v261 = vsel %vm260, %v255, %v257
        %v262 = vsel %vm260, %v257, %v259
        %263 = vrot.lane.b32.xlu0 %v202, 92
        %v264 = vpop.permute.xlu0 %263
        %265 = vrot.lane.b32.xlu0 %v203, 92
        %v266 = vpop.permute.xlu0 %265
        %267 = vrot.lane.b32.xlu0 %v204, 92
        %v268 = vpop.permute.xlu0 %267
        %vm269 = vcmask 752640
        %v270 = vsel %vm269, %v264, %v266
        %v271 = vsel %vm269, %v266, %v268
        %272 = vrot.lane.b32.xlu0 %v202, 91
        %v273 = vpop.permute.xlu0 %272
        %274 = vrot.lane.b32.xlu0 %v203, 91
        %v275 = vpop.permute.xlu0 %274
        %276 = vrot.lane.b32.xlu0 %v204, 91
        %v277 = vpop.permute.xlu0 %276
        %vm278 = vcmask 744448
        %v279 = vsel %vm278, %v273, %v275
        %v280 = vsel %vm278, %v275, %v277
        %281 = vrot.lane.b32.xlu0 %v202, 90
        %v282 = vpop.permute.xlu0 %281
        %283 = vrot.lane.b32.xlu0 %v203, 90
        %v284 = vpop.permute.xlu0 %283
        %285 = vrot.lane.b32.xlu0 %v204, 90
        %v286 = vpop.permute.xlu0 %285
        %vm287 = vcmask 736256
        %v288 = vsel %vm287, %v282, %v284
        %v289 = vsel %vm287, %v284, %v286
        %s290 = smul.u32 %s196, 8
        %s291 = scalar_lea.vmem %s0, %s290
        %v292 = vld [vmem:[%s291] sm:$0xff]
        %293 = vrot.lane.b32.xlu0 %v201, 19
        %v294 = vpop.permute.xlu0 %293
        %295 = vrot.lane.b32.xlu0 %v202, 19
        %v296 = vpop.permute.xlu0 %295
        %297 = vrot.lane.b32.xlu0 %v203, 19
        %v298 = vpop.permute.xlu0 %297
        %299 = vrot.lane.b32.xlu0 %v204, 19
        %v300 = vpop.permute.xlu0 %299
        %301 = vrot.lane.b32.xlu0 %v218, 19
        %v302 = vpop.permute.xlu0 %301
        %303 = vrot.lane.b32.xlu0 %v219, 19
        %v304 = vpop.permute.xlu0 %303
        %305 = vrot.lane.b32.xlu0 %v220, 19
        %v306 = vpop.permute.xlu0 %305
        %307 = vrot.lane.b32.xlu0 %v216, 19
        %v308 = vpop.permute.xlu0 %307
        %309 = vrot.lane.b32.xlu0 %v230, 19
        %v310 = vpop.permute.xlu0 %309
        %311 = vrot.lane.b32.xlu0 %v231, 19
        %v312 = vpop.permute.xlu0 %311
        %313 = vrot.lane.b32.xlu0 %v232, 19
        %v314 = vpop.permute.xlu0 %313
        %315 = vrot.lane.b32.xlu0 %v228, 19
        %v316 = vpop.permute.xlu0 %315
        %317 = vrot.lane.b32.xlu0 %v242, 19
        %v318 = vpop.permute.xlu0 %317
        %319 = vrot.lane.b32.xlu0 %v243, 19
        %v320 = vpop.permute.xlu0 %319
        %321 = vrot.lane.b32.xlu0 %v244, 19
        %v322 = vpop.permute.xlu0 %321
        %323 = vrot.lane.b32.xlu0 %v240, 19
        %v324 = vpop.permute.xlu0 %323
        %325 = vrot.lane.b32.xlu0 %v246, 19
        %v326 = vpop.permute.xlu0 %325
        %327 = vrot.lane.b32.xlu0 %v252, 19
        %v328 = vpop.permute.xlu0 %327
        %329 = vrot.lane.b32.xlu0 %v253, 19
        %v330 = vpop.permute.xlu0 %329
        %331 = vrot.lane.b32.xlu0 %v250, 19
        %v332 = vpop.permute.xlu0 %331
        %333 = vrot.lane.b32.xlu0 %v255, 19
        %v334 = vpop.permute.xlu0 %333
        %335 = vrot.lane.b32.xlu0 %v261, 19
        %v336 = vpop.permute.xlu0 %335
        %337 = vrot.lane.b32.xlu0 %v262, 19
        %v338 = vpop.permute.xlu0 %337
        %339 = vrot.lane.b32.xlu0 %v259, 19
        %v340 = vpop.permute.xlu0 %339
        %341 = vrot.lane.b32.xlu0 %v264, 19
        %v342 = vpop.permute.xlu0 %341
        %343 = vrot.lane.b32.xlu0 %v270, 19
        %v344 = vpop.permute.xlu0 %343
        %345 = vrot.lane.b32.xlu0 %v271, 19
        %v346 = vpop.permute.xlu0 %345
        %347 = vrot.lane.b32.xlu0 %v268, 19
        %v348 = vpop.permute.xlu0 %347
        %349 = vrot.lane.b32.xlu0 %v273, 19
        %v350 = vpop.permute.xlu0 %349
        %351 = vrot.lane.b32.xlu0 %v279, 19
        %v352 = vpop.permute.xlu0 %351
        %353 = vrot.lane.b32.xlu0 %v280, 19
        %v354 = vpop.permute.xlu0 %353
        %355 = vrot.lane.b32.xlu0 %v277, 19
        %v356 = vpop.permute.xlu0 %355
        %357 = vrot.lane.b32.xlu0 %v282, 19
        %v358 = vpop.permute.xlu0 %357
        %359 = vrot.lane.b32.xlu0 %v288, 19
        %v360 = vpop.permute.xlu0 %359
        %361 = vrot.lane.b32.xlu0 %v289, 19
        %v362 = vpop.permute.xlu0 %361
        %363 = vrot.lane.b32.xlu0 %v286, 19
        %v364 = vpop.permute.xlu0 %363
        %vm365 = vcmask 154624
        %v366 = vsel %vm365, %v294, %v296
        %v367 = vsel %vm365, %v296, %v298
        %v368 = vsel %vm365, %v298, %v300
        %v369 = vsel %vm365, %v302, %v304
        %v370 = vsel %vm365, %v304, %v306
        %v371 = vsel %vm365, %v306, %v308
        %v372 = vsel %vm365, %v310, %v312
        %v373 = vsel %vm365, %v312, %v314
        %v374 = vsel %vm365, %v314, %v316
        %v375 = vsel %vm365, %v318, %v320
        %v376 = vsel %vm365, %v320, %v322
        %v377 = vsel %vm365, %v322, %v324
        %v378 = vsel %vm365, %v326, %v328
        %v379 = vsel %vm365, %v328, %v330
        %v380 = vsel %vm365, %v330, %v332
        %v381 = vsel %vm365, %v334, %v336
        %v382 = vsel %vm365, %v336, %v338
        %v383 = vsel %vm365, %v338, %v340
        %v384 = vsel %vm365, %v342, %v344
        %v385 = vsel %vm365, %v344, %v346
        %v386 = vsel %vm365, %v346, %v348
        %v387 = vsel %vm365, %v350, %v352
        %v388 = vsel %vm365, %v352, %v354
        %v389 = vsel %vm365, %v354, %v356
        %v390 = vsel %vm365, %v358, %v360
        %v391 = vsel %vm365, %v360, %v362
        %v392 = vsel %vm365, %v362, %v364
        %vm420 = vcmask 588800
        %v422 = vsel %vm420, %v292, 0
        %424 = vmatprep.subr.mxu0 0.0
        %425 = vmatpush1.msra.mxu0 0.0
        %426 = vmatprep.subr.mxu0 0.0
        %427 = vmatpush1.msra.mxu0 0.0
        %428 = vmatprep.subr.mxu0 0.0
        %429 = vmatpush1.msra.mxu0 0.0
        %430 = vmatprep.subr.mxu0 0.0
        %431 = vmatpush1.msra.mxu0 0.0
        %432 = vmatprep.subr.mxu0 0.0
        %433 = vmatpush1.msra.mxu0 0.0
        %434 = vmatprep.subr.mxu0 0.0
        %435 = vmatpush1.msra.mxu0 0.0
        %436 = vmatprep.subr.mxu0 0.0
        %437 = vmatpush1.msra.mxu0 0.0
        %438 = vmatprep.subr.mxu0 %v391
        %439 = vmatpush1.msra.mxu0 %v390
        %440 = vmatprep.subr.mxu0 %v388
        %441 = vmatpush1.msra.mxu0 %v387
        %442 = vmatprep.subr.mxu0 %v385
        %443 = vmatpush1.msra.mxu0 %v384
        %444 = vmatprep.subr.mxu0 %v382
        %445 = vmatpush1.msra.mxu0 %v381
        %446 = vmatprep.subr.mxu0 %v379
        %447 = vmatpush1.msra.mxu0 %v378
        %448 = vmatprep.subr.mxu0 %v376
        %449 = vmatpush1.msra.mxu0 %v375
        %450 = vmatprep.subr.mxu0 %v373
        %451 = vmatpush1.msra.mxu0 %v372
        %452 = vmatprep.subr.mxu0 %v370
        %453 = vmatpush1.msra.mxu0 %v369
        %454 = vmatprep.subr.mxu0 %v367
        %455 = vmatpush1.msra.mxu0 %v366
        %456 = vmatprep.subr.mxu0 0.0
        %457 = vmatpush2.msra.mxu0 0.0
        %458 = vmatprep.subr.mxu0 0.0
        %459 = vmatpush2.msra.mxu0 0.0
        %460 = vmatprep.subr.mxu0 0.0
        %461 = vmatpush2.msra.mxu0 0.0
        %462 = vmatprep.subr.mxu0 0.0
        %463 = vmatpush2.msra.mxu0 0.0
        %464 = vmatprep.subr.mxu0 0.0
        %465 = vmatpush2.msra.mxu0 0.0
        %466 = vmatprep.subr.mxu0 0.0
        %467 = vmatpush2.msra.mxu0 0.0
        %468 = vmatprep.subr.mxu0 0.0
        %469 = vmatpush2.msra.mxu0 0.0
        %470 = vmatprep.subr.mxu0 0.0
        %471 = vmatpush2.msra.mxu0 0.0
        %472 = vmatprep.subr.mxu0 0.0
        %473 = vmatpush2.msra.mxu0 0.0
        %474 = vmatprep.subr.mxu0 0.0
        %475 = vmatpush2.msra.mxu0 0.0
        %476 = vmatprep.subr.mxu0 0.0
        %477 = vmatpush2.msra.mxu0 0.0
        %478 = vmatprep.subr.mxu0 0.0
        %479 = vmatpush2.msra.mxu0 0.0
        %480 = vmatprep.subr.mxu0 0.0
        %481 = vmatpush2.msra.mxu0 0.0
        %482 = vmatprep.subr.mxu0 0.0
        %483 = vmatpush2.msra.mxu0 0.0
        %484 = vmatprep.subr.mxu0 0.0
        %485 = vmatpush2.msra.mxu0 0.0
        %486 = vmatprep.subr.mxu0 0.0
        %487 = vmatpush2.msra.mxu0 0.0
        %488 = vmatprep.mubr.f32.mxu0 0.0
        %489 = vmatmul.mubr.f32.gmra.mxu0 %v422
        %v490 = vpop.f32.mrf.mxu0
        %v491 = vadd.f32 0.0, %v490
        %v492 = vpop.f32.mrf.mxu0
        %v493 = vadd.f32 0.0, %v492
        %494 = vdwg.mxu0
        %495 = vmatprep.subr.mxu0 0.0
        %496 = vmatpush1.msra.mxu0 0.0
        %497 = vmatprep.subr.mxu0 0.0
        %498 = vmatpush1.msra.mxu0 0.0
        %499 = vmatprep.subr.mxu0 0.0
        %500 = vmatpush1.msra.mxu0 0.0
        %501 = vmatprep.subr.mxu0 0.0
        %502 = vmatpush1.msra.mxu0 0.0
        %503 = vmatprep.subr.mxu0 0.0
        %504 = vmatpush1.msra.mxu0 0.0
        %505 = vmatprep.subr.mxu0 0.0
        %506 = vmatpush1.msra.mxu0 0.0
        %507 = vmatprep.subr.mxu0 0.0
        %508 = vmatpush1.msra.mxu0 0.0
        %509 = vmatprep.subr.mxu0 0.0
        %510 = vmatpush1.msra.mxu0 %v392
        %511 = vmatprep.subr.mxu0 0.0
        %512 = vmatpush1.msra.mxu0 %v389
        %513 = vmatprep.subr.mxu0 0.0
        %514 = vmatpush1.msra.mxu0 %v386
        %515 = vmatprep.subr.mxu0 0.0
        %516 = vmatpush1.msra.mxu0 %v383
        %517 = vmatprep.subr.mxu0 0.0
        %518 = vmatpush1.msra.mxu0 %v380
        %519 = vmatprep.subr.mxu0 0.0
        %520 = vmatpush1.msra.mxu0 %v377
        %521 = vmatprep.subr.mxu0 0.0
        %522 = vmatpush1.msra.mxu0 %v374
        %523 = vmatprep.subr.mxu0 0.0
        %524 = vmatpush1.msra.mxu0 %v371
        %525 = vmatprep.subr.mxu0 0.0
        %526 = vmatpush1.msra.mxu0 %v368
        %527 = vmatprep.subr.mxu0 0.0
        %528 = vmatpush2.msra.mxu0 0.0
        %529 = vmatprep.subr.mxu0 0.0
        %530 = vmatpush2.msra.mxu0 0.0
        %531 = vmatprep.subr.mxu0 0.0
        %532 = vmatpush2.msra.mxu0 0.0
        %533 = vmatprep.subr.mxu0 0.0
        %534 = vmatpush2.msra.mxu0 0.0
        %535 = vmatprep.subr.mxu0 0.0
        %536 = vmatpush2.msra.mxu0 0.0
        %537 = vmatprep.subr.mxu0 0.0
        %538 = vmatpush2.msra.mxu0 0.0
        %539 = vmatprep.subr.mxu0 0.0
        %540 = vmatpush2.msra.mxu0 0.0
        %541 = vmatprep.subr.mxu0 0.0
        %542 = vmatpush2.msra.mxu0 0.0
        %543 = vmatprep.subr.mxu0 0.0
        %544 = vmatpush2.msra.mxu0 0.0
        %545 = vmatprep.subr.mxu0 0.0
        %546 = vmatpush2.msra.mxu0 0.0
        %547 = vmatprep.subr.mxu0 0.0
        %548 = vmatpush2.msra.mxu0 0.0
        %549 = vmatprep.subr.mxu0 0.0
        %550 = vmatpush2.msra.mxu0 0.0
        %551 = vmatprep.subr.mxu0 0.0
        %552 = vmatpush2.msra.mxu0 0.0
        %553 = vmatprep.subr.mxu0 0.0
        %554 = vmatpush2.msra.mxu0 0.0
        %555 = vmatprep.subr.mxu0 0.0
        %556 = vmatpush2.msra.mxu0 0.0
        %557 = vmatprep.subr.mxu0 0.0
        %558 = vmatpush2.msra.mxu0 0.0
        %559 = vmatprep.mubr.f32.mxu0 0.0
        %560 = vmatmul.mubr.f32.gmra.mxu0 %v422
        %v561 = vpop.f32.mrf.mxu0
        %v562 = vadd.f32 0.0, %v561
        %v563 = vpop.f32.mrf.mxu0
        %564 = vdwg.mxu0
        %v565 = vmax.f32 %v491, 0.0
        %v566 = vmax.f32 %v493, 0.0
        %v567 = vmax.f32 %v562, 0.0
        %v568 = vmul.f32 %v565, %v183
        %v569 = vmul.f32 %v566, %v187
        %v570 = vmul.f32 %v567, %v191
        %571 = vst [vmem:[#allocation2 + $0x8] sm:$0xff] %v568
        %572 = vst [vmem:[#allocation2 + $0x10] sm:$0xff] %v569
        %vm573 = vcmask 556032
        %574 = vst.msk [vmem:[#allocation2 + $0x18] sm:$0xff] %vm573, %v570
      $region37: #{kc_net_forward.1} parent=31 // loop_footer
        %s200 = sadd.s32 1, %s196
      $region38: #{kc_net_forward.1} parent=31 // loop_footer_branch
        %195 = sbr.rel target = $region34
      $region39: #{kc_net_forward.1} parent=31 // loop_exit
        _
      %v575 = vld [vmem:[#allocation2] sm:$0xff]
      %v576 = vld [vmem:[#allocation2 + $0x8] sm:$0xff]
      %v577 = vld [vmem:[#allocation2 + $0x10] sm:$0xff]
      %v578 = vld [vmem:[#allocation2 + $0x18] sm:$0xff]
      %583 = vrot.lane.b32.xlu0 %v575, 127
      %v584 = vpop.permute.xlu0 %583
      %585 = vrot.lane.b32.xlu0 %v576, 127
      %v586 = vpop.permute.xlu0 %585
      %587 = vrot.lane.b32.xlu0 %v577, 127
      %v588 = vpop.permute.xlu0 %587
      %589 = vrot.lane.b32.xlu0 %v578, 127
      %v590 = vpop.permute.xlu0 %589
      %vm591 = vcmask 1039360
      %v592 = vsel %vm591, %v584, %v586
      %v593 = vsel %vm591, %v586, %v588
      %v594 = vsel %vm591, %v588, %v590
      %595 = vrot.lane.b32.xlu0 %v575, 126
      %v596 = vpop.permute.xlu0 %595
      %597 = vrot.lane.b32.xlu0 %v576, 126
      %v598 = vpop.permute.xlu0 %597
      %599 = vrot.lane.b32.xlu0 %v577, 126
      %v600 = vpop.permute.xlu0 %599
      %601 = vrot.lane.b32.xlu0 %v578, 126
      %v602 = vpop.permute.xlu0 %601
      %vm603 = vcmask 1031168
      %v604 = vsel %vm603, %v596, %v598
      %v605 = vsel %vm603, %v598, %v600
      %v606 = vsel %vm603, %v600, %v602
      %607 = vrot.lane.b32.xlu0 %v575, 110
      %v608 = vpop.permute.xlu0 %607
      %609 = vrot.lane.b32.xlu0 %v576, 110
      %v610 = vpop.permute.xlu0 %609
      %611 = vrot.lane.b32.xlu0 %v577, 110
      %v612 = vpop.permute.xlu0 %611
      %613 = vrot.lane.b32.xlu0 %v578, 110
      %v614 = vpop.permute.xlu0 %613
      %vm615 = vcmask 900096
      %v616 = vsel %vm615, %v608, %v610
      %v617 = vsel %vm615, %v610, %v612
      %v618 = vsel %vm615, %v612, %v614
      %619 = vrot.lane.b32.xlu0 %v576, 109
      %v620 = vpop.permute.xlu0 %619
      %621 = vrot.lane.b32.xlu0 %v577, 109
      %v622 = vpop.permute.xlu0 %621
      %623 = vrot.lane.b32.xlu0 %v578, 109
      %v624 = vpop.permute.xlu0 %623
      %vm625 = vcmask 891904
      %v626 = vsel %vm625, %v620, %v622
      %v627 = vsel %vm625, %v622, %v624
      %628 = vrot.lane.b32.xlu0 %v576, 108
      %v629 = vpop.permute.xlu0 %628
      %630 = vrot.lane.b32.xlu0 %v577, 108
      %v631 = vpop.permute.xlu0 %630
      %632 = vrot.lane.b32.xlu0 %v578, 108
      %v633 = vpop.permute.xlu0 %632
      %vm634 = vcmask 883712
      %v635 = vsel %vm634, %v629, %v631
      %v636 = vsel %vm634, %v631, %v633
      %637 = vrot.lane.b32.xlu0 %v576, 92
      %v638 = vpop.permute.xlu0 %637
      %639 = vrot.lane.b32.xlu0 %v577, 92
      %v640 = vpop.permute.xlu0 %639
      %641 = vrot.lane.b32.xlu0 %v578, 92
      %v642 = vpop.permute.xlu0 %641
      %vm643 = vcmask 752640
      %v644 = vsel %vm643, %v638, %v640
      %v645 = vsel %vm643, %v640, %v642
      %646 = vrot.lane.b32.xlu0 %v576, 91
      %v647 = vpop.permute.xlu0 %646
      %648 = vrot.lane.b32.xlu0 %v577, 91
      %v649 = vpop.permute.xlu0 %648
      %650 = vrot.lane.b32.xlu0 %v578, 91
      %v651 = vpop.permute.xlu0 %650
      %vm652 = vcmask 744448
      %v653 = vsel %vm652, %v647, %v649
      %v654 = vsel %vm652, %v649, %v651
      %655 = vrot.lane.b32.xlu0 %v576, 90
      %v656 = vpop.permute.xlu0 %655
      %657 = vrot.lane.b32.xlu0 %v577, 90
      %v658 = vpop.permute.xlu0 %657
      %659 = vrot.lane.b32.xlu0 %v578, 90
      %v660 = vpop.permute.xlu0 %659
      %vm661 = vcmask 736256
      %v662 = vsel %vm661, %v656, %v658
      %v663 = vsel %vm661, %v658, %v660
      %s664 = scalar_lea.vmem %s0, 152
      %v665 = vld [vmem:[%s664] sm:$0xff]
      %666 = vrot.lane.b32.xlu0 %v575, 19
      %v667 = vpop.permute.xlu0 %666
      %668 = vrot.lane.b32.xlu0 %v576, 19
      %v669 = vpop.permute.xlu0 %668
      %670 = vrot.lane.b32.xlu0 %v577, 19
      %v671 = vpop.permute.xlu0 %670
      %672 = vrot.lane.b32.xlu0 %v578, 19
      %v673 = vpop.permute.xlu0 %672
      %674 = vrot.lane.b32.xlu0 %v592, 19
      %v675 = vpop.permute.xlu0 %674
      %676 = vrot.lane.b32.xlu0 %v593, 19
      %v677 = vpop.permute.xlu0 %676
      %678 = vrot.lane.b32.xlu0 %v594, 19
      %v679 = vpop.permute.xlu0 %678
      %680 = vrot.lane.b32.xlu0 %v590, 19
      %v681 = vpop.permute.xlu0 %680
      %682 = vrot.lane.b32.xlu0 %v604, 19
      %v683 = vpop.permute.xlu0 %682
      %684 = vrot.lane.b32.xlu0 %v605, 19
      %v685 = vpop.permute.xlu0 %684
      %686 = vrot.lane.b32.xlu0 %v606, 19
      %v687 = vpop.permute.xlu0 %686
      %688 = vrot.lane.b32.xlu0 %v602, 19
      %v689 = vpop.permute.xlu0 %688
      %690 = vrot.lane.b32.xlu0 %v616, 19
      %v691 = vpop.permute.xlu0 %690
      %692 = vrot.lane.b32.xlu0 %v617, 19
      %v693 = vpop.permute.xlu0 %692
      %694 = vrot.lane.b32.xlu0 %v618, 19
      %v695 = vpop.permute.xlu0 %694
      %696 = vrot.lane.b32.xlu0 %v614, 19
      %v697 = vpop.permute.xlu0 %696
      %698 = vrot.lane.b32.xlu0 %v620, 19
      %v699 = vpop.permute.xlu0 %698
      %700 = vrot.lane.b32.xlu0 %v626, 19
      %v701 = vpop.permute.xlu0 %700
      %702 = vrot.lane.b32.xlu0 %v627, 19
      %v703 = vpop.permute.xlu0 %702
      %704 = vrot.lane.b32.xlu0 %v624, 19
      %v705 = vpop.permute.xlu0 %704
      %706 = vrot.lane.b32.xlu0 %v629, 19
      %v707 = vpop.permute.xlu0 %706
      %708 = vrot.lane.b32.xlu0 %v635, 19
      %v709 = vpop.permute.xlu0 %708
      %710 = vrot.lane.b32.xlu0 %v636, 19
      %v711 = vpop.permute.xlu0 %710
      %712 = vrot.lane.b32.xlu0 %v633, 19
      %v713 = vpop.permute.xlu0 %712
      %714 = vrot.lane.b32.xlu0 %v638, 19
      %v715 = vpop.permute.xlu0 %714
      %716 = vrot.lane.b32.xlu0 %v644, 19
      %v717 = vpop.permute.xlu0 %716
      %718 = vrot.lane.b32.xlu0 %v645, 19
      %v719 = vpop.permute.xlu0 %718
      %720 = vrot.lane.b32.xlu0 %v642, 19
      %v721 = vpop.permute.xlu0 %720
      %722 = vrot.lane.b32.xlu0 %v647, 19
      %v723 = vpop.permute.xlu0 %722
      %724 = vrot.lane.b32.xlu0 %v653, 19
      %v725 = vpop.permute.xlu0 %724
      %726 = vrot.lane.b32.xlu0 %v654, 19
      %v727 = vpop.permute.xlu0 %726
      %728 = vrot.lane.b32.xlu0 %v651, 19
      %v729 = vpop.permute.xlu0 %728
      %730 = vrot.lane.b32.xlu0 %v656, 19
      %v731 = vpop.permute.xlu0 %730
      %732 = vrot.lane.b32.xlu0 %v662, 19
      %v733 = vpop.permute.xlu0 %732
      %734 = vrot.lane.b32.xlu0 %v663, 19
      %v735 = vpop.permute.xlu0 %734
      %736 = vrot.lane.b32.xlu0 %v660, 19
      %v737 = vpop.permute.xlu0 %736
      %vm738 = vcmask 154624
      %v739 = vsel %vm738, %v667, %v669
      %v740 = vsel %vm738, %v669, %v671
      %v741 = vsel %vm738, %v671, %v673
      %v742 = vsel %vm738, %v675, %v677
      %v743 = vsel %vm738, %v677, %v679
      %v744 = vsel %vm738, %v679, %v681
      %v745 = vsel %vm738, %v683, %v685
      %v746 = vsel %vm738, %v685, %v687
      %v747 = vsel %vm738, %v687, %v689
      %v748 = vsel %vm738, %v691, %v693
      %v749 = vsel %vm738, %v693, %v695
      %v750 = vsel %vm738, %v695, %v697
      %v751 = vsel %vm738, %v699, %v701
      %v752 = vsel %vm738, %v701, %v703
      %v753 = vsel %vm738, %v703, %v705
      %v754 = vsel %vm738, %v707, %v709
      %v755 = vsel %vm738, %v709, %v711
      %v756 = vsel %vm738, %v711, %v713
      %v757 = vsel %vm738, %v715, %v717
      %v758 = vsel %vm738, %v717, %v719
      %v759 = vsel %vm738, %v719, %v721
      %v760 = vsel %vm738, %v723, %v725
      %v761 = vsel %vm738, %v725, %v727
      %v762 = vsel %vm738, %v727, %v729
      %v763 = vsel %vm738, %v731, %v733
      %v764 = vsel %vm738, %v733, %v735
      %v765 = vsel %vm738, %v735, %v737
      %vm793 = vcmask 588800
      %v795 = vsel %vm793, %v665, 0
      %797 = vmatprep.subr.mxu0 0.0
      %798 = vmatpush1.msra.mxu0 0.0
      %799 = vmatprep.subr.mxu0 0.0
      %800 = vmatpush1.msra.mxu0 0.0
      %801 = vmatprep.subr.mxu0 0.0
      %802 = vmatpush1.msra.mxu0 0.0
      %803 = vmatprep.subr.mxu0 0.0
      %804 = vmatpush1.msra.mxu0 0.0
      %805 = vmatprep.subr.mxu0 0.0
      %806 = vmatpush1.msra.mxu0 0.0
      %807 = vmatprep.subr.mxu0 0.0
      %808 = vmatpush1.msra.mxu0 0.0
      %809 = vmatprep.subr.mxu0 0.0
      %810 = vmatpush1.msra.mxu0 0.0
      %811 = vmatprep.subr.mxu0 %v764
      %812 = vmatpush1.msra.mxu0 %v763
      %813 = vmatprep.subr.mxu0 %v761
      %814 = vmatpush1.msra.mxu0 %v760
      %815 = vmatprep.subr.mxu0 %v758
      %816 = vmatpush1.msra.mxu0 %v757
      %817 = vmatprep.subr.mxu0 %v755
      %818 = vmatpush1.msra.mxu0 %v754
      %819 = vmatprep.subr.mxu0 %v752
      %820 = vmatpush1.msra.mxu0 %v751
      %821 = vmatprep.subr.mxu0 %v749
      %822 = vmatpush1.msra.mxu0 %v748
      %823 = vmatprep.subr.mxu0 %v746
      %824 = vmatpush1.msra.mxu0 %v745
      %825 = vmatprep.subr.mxu0 %v743
      %826 = vmatpush1.msra.mxu0 %v742
      %827 = vmatprep.subr.mxu0 %v740
      %828 = vmatpush1.msra.mxu0 %v739
      %829 = vmatprep.subr.mxu0 0.0
      %830 = vmatpush2.msra.mxu0 0.0
      %831 = vmatprep.subr.mxu0 0.0
      %832 = vmatpush2.msra.mxu0 0.0
      %833 = vmatprep.subr.mxu0 0.0
      %834 = vmatpush2.msra.mxu0 0.0
      %835 = vmatprep.subr.mxu0 0.0
      %836 = vmatpush2.msra.mxu0 0.0
      %837 = vmatprep.subr.mxu0 0.0
      %838 = vmatpush2.msra.mxu0 0.0
      %839 = vmatprep.subr.mxu0 0.0
      %840 = vmatpush2.msra.mxu0 0.0
      %841 = vmatprep.subr.mxu0 0.0
      %842 = vmatpush2.msra.mxu0 0.0
      %843 = vmatprep.subr.mxu0 0.0
      %844 = vmatpush2.msra.mxu0 0.0
      %845 = vmatprep.subr.mxu0 0.0
      %846 = vmatpush2.msra.mxu0 0.0
      %847 = vmatprep.subr.mxu0 0.0
      %848 = vmatpush2.msra.mxu0 0.0
      %849 = vmatprep.subr.mxu0 0.0
      %850 = vmatpush2.msra.mxu0 0.0
      %851 = vmatprep.subr.mxu0 0.0
      %852 = vmatpush2.msra.mxu0 0.0
      %853 = vmatprep.subr.mxu0 0.0
      %854 = vmatpush2.msra.mxu0 0.0
      %855 = vmatprep.subr.mxu0 0.0
      %856 = vmatpush2.msra.mxu0 0.0
      %857 = vmatprep.subr.mxu0 0.0
      %858 = vmatpush2.msra.mxu0 0.0
      %859 = vmatprep.subr.mxu0 0.0
      %860 = vmatpush2.msra.mxu0 0.0
      %861 = vmatprep.mubr.f32.mxu0 0.0
      %862 = vmatmul.mubr.f32.gmra.mxu0 %v795
      %v863 = vpop.f32.mrf.mxu0
      %v864 = vadd.f32 0.0, %v863
      %v865 = vpop.f32.mrf.mxu0
      %v866 = vadd.f32 0.0, %v865
      %867 = vdwg.mxu0
      %868 = vmatprep.subr.mxu0 0.0
      %869 = vmatpush1.msra.mxu0 0.0
      %870 = vmatprep.subr.mxu0 0.0
      %871 = vmatpush1.msra.mxu0 0.0
      %872 = vmatprep.subr.mxu0 0.0
      %873 = vmatpush1.msra.mxu0 0.0
      %874 = vmatprep.subr.mxu0 0.0
      %875 = vmatpush1.msra.mxu0 0.0
      %876 = vmatprep.subr.mxu0 0.0
      %877 = vmatpush1.msra.mxu0 0.0
      %878 = vmatprep.subr.mxu0 0.0
      %879 = vmatpush1.msra.mxu0 0.0
      %880 = vmatprep.subr.mxu0 0.0
      %881 = vmatpush1.msra.mxu0 0.0
      %882 = vmatprep.subr.mxu0 0.0
      %883 = vmatpush1.msra.mxu0 %v765
      %884 = vmatprep.subr.mxu0 0.0
      %885 = vmatpush1.msra.mxu0 %v762
      %886 = vmatprep.subr.mxu0 0.0
      %887 = vmatpush1.msra.mxu0 %v759
      %888 = vmatprep.subr.mxu0 0.0
      %889 = vmatpush1.msra.mxu0 %v756
      %890 = vmatprep.subr.mxu0 0.0
      %891 = vmatpush1.msra.mxu0 %v753
      %892 = vmatprep.subr.mxu0 0.0
      %893 = vmatpush1.msra.mxu0 %v750
      %894 = vmatprep.subr.mxu0 0.0
      %895 = vmatpush1.msra.mxu0 %v747
      %896 = vmatprep.subr.mxu0 0.0
      %897 = vmatpush1.msra.mxu0 %v744
      %898 = vmatprep.subr.mxu0 0.0
      %899 = vmatpush1.msra.mxu0 %v741
      %900 = vmatprep.subr.mxu0 0.0
      %901 = vmatpush2.msra.mxu0 0.0
      %902 = vmatprep.subr.mxu0 0.0
      %903 = vmatpush2.msra.mxu0 0.0
      %904 = vmatprep.subr.mxu0 0.0
      %905 = vmatpush2.msra.mxu0 0.0
      %906 = vmatprep.subr.mxu0 0.0
      %907 = vmatpush2.msra.mxu0 0.0
      %908 = vmatprep.subr.mxu0 0.0
      %909 = vmatpush2.msra.mxu0 0.0
      %910 = vmatprep.subr.mxu0 0.0
      %911 = vmatpush2.msra.mxu0 0.0
      %912 = vmatprep.subr.mxu0 0.0
      %913 = vmatpush2.msra.mxu0 0.0
      %914 = vmatprep.subr.mxu0 0.0
      %915 = vmatpush2.msra.mxu0 0.0
      %916 = vmatprep.subr.mxu0 0.0
      %917 = vmatpush2.msra.mxu0 0.0
      %918 = vmatprep.subr.mxu0 0.0
      %919 = vmatpush2.msra.mxu0 0.0
      %920 = vmatprep.subr.mxu0 0.0
      %921 = vmatpush2.msra.mxu0 0.0
      %922 = vmatprep.subr.mxu0 0.0
      %923 = vmatpush2.msra.mxu0 0.0
      %924 = vmatprep.subr.mxu0 0.0
      %925 = vmatpush2.msra.mxu0 0.0
      %926 = vmatprep.subr.mxu0 0.0
      %927 = vmatpush2.msra.mxu0 0.0
      %928 = vmatprep.subr.mxu0 0.0
      %929 = vmatpush2.msra.mxu0 0.0
      %930 = vmatprep.subr.mxu0 0.0
      %931 = vmatpush2.msra.mxu0 0.0
      %932 = vmatprep.mubr.f32.mxu0 0.0
      %933 = vmatmul.mubr.f32.gmra.mxu0 %v795
      %v934 = vpop.f32.mrf.mxu0
      %v935 = vadd.f32 0.0, %v934
      %v936 = vpop.f32.mrf.mxu0
      %937 = vdwg.mxu0
      %v938 = vld [vmem:[%s161] sm:$0x7]
      %v940 = vlaneseq
      %v941 = vshrl.u32 %v940, 7
      %v942 = vsub.s32 0, %v941
      %v943 = vrot.slane %v938, %v942
      %v944 = vlaneseq
      %v945 = vshrl.u32 %v944, 7
      %v946 = vsub.s32 1, %v945
      %v947 = vrot.slane %v938, %v946
      %v948 = vlaneseq
      %v949 = vshrl.u32 %v948, 7
      %v950 = vsub.s32 2, %v949
      %v951 = vrot.slane %v938, %v950
      %v955 = vadd.f32 %v864, %v943
      %v956 = vadd.f32 %v866, %v947
      %v957 = vadd.f32 %v935, %v951
      %v958 = vld [vmem:[%s2] sm:$0x7]
      %v960 = vlaneseq
      %v961 = vshrl.u32 %v960, 7
      %v962 = vsub.s32 0, %v961
      %v963 = vrot.slane %v958, %v962
      %v964 = vlaneseq
      %v965 = vshrl.u32 %v964, 7
      %v966 = vsub.s32 1, %v965
      %v967 = vrot.slane %v958, %v966
      %v968 = vlaneseq
      %v969 = vshrl.u32 %v968, 7
      %v970 = vsub.s32 2, %v969
      %v971 = vrot.slane %v958, %v970
      %v975 = vmul.f32 %v955, %v963
      %v976 = vmul.f32 %v956, %v967
      %v977 = vmul.f32 %v957, %v971
      %v981 = vcombine.low %v975, %v976
      %v983 = vunpack.c.l.s4 1966171168
      %v984 = vunpack.c.0.s8 %v983
      %v985 = vlaneseq
      %v986 = vshrl.u32 %v985, 7
      %v987 = vsub.s32 %v984, %v986
      %v988 = vrot.slane %v981, %v987
      %v990 = vunpack.c.l.s4 1966171168
      %v991 = vunpack.c.0.s8 %v990
      %v992 = vlaneseq
      %v993 = vshrl.u32 %v992, 7
      %v994 = vsub.s32 %v991, %v993
      %v995 = vrot.slane %v977, %v994
      %v996 = vcombine.low %v988, %v995
      %v998 = vunpack.c.l.s4 1966171168
      %v999 = vunpack.c.0.s8 %v998
      %v1000 = vlaneseq
      %v1001 = vshrl.u32 %v1000, 7
      %v1002 = vsub.s32 %v999, %v1001
      %v1003 = vrot.slane %v996, %v1002
      %1005 = vst.msk [vmem:[%s165] sm:$0x7] %vm174, %v1003
      %p1006 = scmp.lt.s32.totalorder %s14, 1
      %s1007 = scalar_select %p1006, %s14, 1
      %s1008 = smul.addr %s1007, 3
      %s1009 = scalar_lea.vmem %s3, %s1008
      // Predicated region
      $region40: #{kc_net_forward.1} parent=31 // pred_check
        %p1010 = pneg %p100
      $region41: #{kc_net_forward.1} parent=31 // pred_check_branch
        %1012 = sbr.rel (%p1010) target = $region43
      $region42: #{kc_net_forward.1} parent=31 // pred_region
        _
      $region43: #{kc_net_forward.1} parent=31 // pred_fallthru
        _
    $region32: #{kc_net_forward.1} parent=5 // pred_fallthru
      _
    %p1013 = scmp.le.s32.totalorder 2, %s9
    // Predicated region
    $region44: #{kc_net_forward.1} parent=5 // pred_check
      %p1014 = pneg %p1013
    $region45: #{kc_net_forward.1} parent=5 // pred_check_branch
      %1016 = sbr.rel (%p1014) target = $region47
    $region46: #{kc_net_forward.1} parent=5 // pred_region
      %s1017 = ssub.s32 %s9, 2
      // Predicated region
      $region48: #{kc_net_forward.1} parent=46 // pred_check
        %p1018 = pneg %p106
      $region49: #{kc_net_forward.1} parent=46 // pred_check_branch
        %1020 = sbr.rel (%p1018) target = $region51
      $region50: #{kc_net_forward.1} parent=46 // pred_region
        %p1021 = scmp.lt.s32.totalorder %s15, 1
        %s1022 = scalar_select %p1021, %s15, 1
        %s1023 = smul.addr %s1022, 3
        %s1024 = scalar_lea.vmem %s3, %s1023
      $region51: #{kc_net_forward.1} parent=46 // pred_fallthru
        _
    $region47: #{kc_net_forward.1} parent=5 // pred_fallthru
      _
  $region6: #{kc_net_forward.1} parent=0 // loop_footer
    %s13 = sadd.s32 1, %s9
  $region7: #{kc_net_forward.1} parent=0 // loop_footer_branch
    %8 = sbr.rel target = $region3
  $region8: #{kc_net_forward.1} parent=0 // loop_exit
    _

</llo_original>
